<compile_context>
chip_gen: v7x
topology: tpu7x:2x2x1
jax: 0.10.0
libtpu: 0.0.40
codegen_flags: <defaults>
</compile_context>

<pallas_src>
import functools
import math

import numpy as np

import jax
import jax.numpy as jnp
from jax.experimental import pallas as pl
from jax.experimental.pallas import tpu as pltpu

# Hyperparameters implied by the module's globals.
SEQ_LEN = 8
D_MODEL = 32

_VMEM_LIMIT_BYTES = 32 * 1024 * 1024   # safe on v5e/v6e (128 MiB) and v7x (64 MiB)
_VMEM_HEADROOM = 2 * 1024 * 1024


def _build_pe_matrix(seq_len: int, d_model: int) -> jnp.ndarray:
    """Exact reproduction of the __init__ double loop (exponent uses i, not i//2)."""
    pos = jnp.arange(seq_len, dtype=jnp.float32)[:, None]        # (S, 1)
    i = jnp.arange(d_model, dtype=jnp.float32)[None, :]          # (1, D)
    angle = pos / jnp.power(10000.0, 2.0 * i / d_model)          # (S, D)
    pe = jnp.where((jnp.arange(d_model) % 2 == 0)[None, :],
                   jnp.sin(angle), jnp.cos(angle))
    return pe[None, :, :]                                        # (1, S, D)


def _pos_enc_kernel(x_ref, pe_ref, o_ref, *, scale):
    # x_ref / o_ref: (block_b, col_tile) lane-dense slab.
    # pe_ref: (1, col_tile) f32, broadcast over rows by the VPU.
    # Upcast to f32 for the scale+add so bf16 inputs keep f32-equivalent math.
    x = x_ref[...].astype(jnp.float32)
    o_ref[...] = (x * scale + pe_ref[...]).astype(o_ref.dtype)


def _choose_tiles(n_rows, n_cols, itemsize, budget_bytes, *, target_steps=8):
    """Pick (block_b, col_tile) so each block stays under budget_bytes and the
    grid has roughly `target_steps` steps for pipelining / megacore sharding."""
    sub = 8 if itemsize >= 4 else 16      # sublane multiple (bf16 packs 2/ sublane)

    # Column tile: multiple of 128 (or full width) so stores stay lane-dense.
    max_cols = max(128, (budget_bytes // (sub * itemsize)) // 128 * 128)
    if n_cols <= max_cols:
        col_tile = n_cols                 # full width; legal even if not 128-aligned
    else:
        col_tile = max_cols               # 128-multiple; ragged edge handled by Pallas
    n_col_blocks = pl.cdiv(n_cols, col_tile)

    # Row tile: as many rows as fit the budget, but keep enough total steps.
    max_rows = max(sub, (budget_bytes // (col_tile * itemsize)) // sub * sub)
    want_row_blocks = max(1, -(-target_steps // n_col_blocks))   # ceil
    rows_per_block = max(1, -(-n_rows // want_row_blocks))       # ceil
    block_b = min(max_rows, rows_per_block, n_rows)
    if block_b < n_rows:
        # (8,128) rule: second-to-last block dim must be a multiple of 8
        # (we use `sub`) or equal the full dim.
        block_b = max(sub, (block_b // sub) * sub)
        block_b = min(block_b, n_rows)
    return block_b, col_tile


def positional_encoder(x: jnp.ndarray, pe: jnp.ndarray, *,
                       vmem_limit_bytes: int = _VMEM_LIMIT_BYTES,
                       target_steps: int = 8) -> jnp.ndarray:
    """x: (B, S, D) float32/bfloat16 ; pe: (1, S_full, D) with S <= S_full."""
    b, s, d = x.shape
    n_cols = s * d
    scale = float(math.sqrt(d))

    # Lane-dense 2-D views.  Row-major flatten means the first S*D columns of
    # the flattened full pe equal pe[:, :s, :].reshape(1, s*d), so the runtime
    # seq_len slice of the forward pass is preserved.
    x2 = x.reshape(b, n_cols)
    pe_flat = pe.astype(jnp.float32).reshape(1, pe.shape[1] * pe.shape[2])
    if pe_flat.shape[1] != n_cols:
        pe_flat = pe_flat[:, :n_cols]

    # Real per-step footprint ~ 2 buffers x (x block + out block) + pe block
    # => ~5 shares of the per-block budget.
    budget = max(256 * 1024, (vmem_limit_bytes - _VMEM_HEADROOM) // 5)
    block_b, col_tile = _choose_tiles(b, n_cols, x.dtype.itemsize, budget,
                                      target_steps=target_steps)

    # Grid: (columns, rows).  Rows innermost so the PE block index (0, j) is
    # constant across consecutive steps -> PE tile stays resident in VMEM.
    grid = (pl.cdiv(n_cols, col_tile), pl.cdiv(b, block_b))

    out2 = pl.pallas_call(
        functools.partial(_pos_enc_kernel, scale=scale),
        out_shape=jax.ShapeDtypeStruct((b, n_cols), x.dtype),
        grid_spec=pltpu.PrefetchScalarGridSpec(
            num_scalar_prefetch=0,
            grid=grid,
            in_specs=[
                # x: one lane-dense tile per step.
                pl.BlockSpec((block_b, col_tile), lambda j, i: (i, j)),
                # pe: constant block index along the (inner) row axis.
                pl.BlockSpec((1, col_tile), lambda j, i: (0, j)),
            ],
            out_specs=pl.BlockSpec((block_b, col_tile), lambda j, i: (i, j)),
        ),
        compiler_params=pltpu.CompilerParams(
            dimension_semantics=("parallel", "parallel"),
            vmem_limit_bytes=vmem_limit_bytes,
        ),
    )(x2, pe_flat)

    return out2.reshape(b, s, d)


if __name__ == "__main__":
    key = jax.random.PRNGKey(0)
    batch = 2
    x = jax.random.normal(key, (batch, SEQ_LEN, D_MODEL), dtype=jnp.float32)

    pe = _build_pe_matrix(SEQ_LEN, D_MODEL)

    # Independent golden PE: direct Python double loop mirroring the torch __init__.
    pe_golden = np.zeros((SEQ_LEN, D_MODEL), dtype=np.float32)
    for pos in range(SEQ_LEN):
        for i in range(D_MODEL):
            if i % 2 == 0:
                pe_golden[pos, i] = math.sin(pos / 10000 ** (2 * i / D_MODEL))
            else:
                pe_golden[pos, i] = math.cos(pos / 10000 ** (2 * i / D_MODEL))
    assert np.allclose(np.asarray(pe[0]), pe_golden, atol=1e-5, rtol=1e-5)
    pe_golden_j = jnp.asarray(pe_golden)[None]

    # f32 path.
    out = jax.block_until_ready(positional_encoder(x, pe))
    ref = x * math.sqrt(D_MODEL) + pe_golden_j
    assert out.shape == (batch, SEQ_LEN, D_MODEL)
    assert jnp.allclose(out, ref, atol=1e-5, rtol=1e-5)

    # bf16 path (halves HBM traffic; f32 math inside the kernel).
    x_bf16 = x.astype(jnp.bfloat16)
    out_bf16 = jax.block_until_ready(positional_encoder(x_bf16, pe))
    ref_bf16 = (x_bf16.astype(jnp.float32) * math.sqrt(D_MODEL)
                + pe_golden_j).astype(jnp.bfloat16)
    assert out_bf16.dtype == jnp.bfloat16
    assert jnp.allclose(out_bf16.astype(jnp.float32),
                        ref_bf16.astype(jnp.float32), atol=2e-2, rtol=2e-2)

    print("KERNEL_OK")
</pallas_src>

<mosaic_0001>
module attributes {stable_mosaic.version = 11 : i64} {
  func.func @_pos_enc_kernel(%arg0: i32, %arg1: i32, %arg2: memref<2x256xf32, #tpu.memory_space<vmem>>, %arg3: memref<1x256xf32, #tpu.memory_space<vmem>>, %arg4: memref<2x256xf32, #tpu.memory_space<vmem>>) attributes {dimension_semantics = [#tpu.dimension_semantics<parallel>, #tpu.dimension_semantics<parallel>], iteration_bounds = array<i64: 1, 1>, scalar_prefetch = 0 : i64, scratch_operands = 0 : i64, tpu.core_type = #tpu.core_type<tc>, window_params = [{transform_indices = @transform_0, window_bounds = array<i64: 2, 256>}, {transform_indices = @transform_1, window_bounds = array<i64: 1, 256>}, {transform_indices = @transform_2, window_bounds = array<i64: 2, 256>}]} {
    %c0 = arith.constant 0 : index
    %c0_0 = arith.constant 0 : index
    %0 = vector.load %arg2[%c0, %c0_0] : memref<2x256xf32, #tpu.memory_space<vmem>>, vector<2x256xf32>
    %cst = arith.constant 5.65685415 : f32
    %1 = vector.broadcast %cst : f32 to vector<2x256xf32>
    %2 = arith.mulf %0, %1 : vector<2x256xf32>
    %c0_1 = arith.constant 0 : index
    %c0_2 = arith.constant 0 : index
    %3 = vector.load %arg3[%c0_1, %c0_2] : memref<1x256xf32, #tpu.memory_space<vmem>>, vector<1x256xf32>
    %4 = vector.broadcast %3 : vector<1x256xf32> to vector<2x256xf32>
    %5 = arith.addf %2, %4 : vector<2x256xf32>
    %c0_3 = arith.constant 0 : index
    %c0_4 = arith.constant 0 : index
    %6 = vector.load %arg4[%c0_3, %c0_4] : memref<2x256xf32, #tpu.memory_space<vmem>>, vector<2x256xf32>
    tpu.vector_store %arg4[%c0_3, %c0_4], %5 {strides = array<i32>} : memref<2x256xf32, #tpu.memory_space<vmem>>, vector<2x256xf32>,
    return
  }
  func.func @transform_0(%arg0: i32, %arg1: i32) -> (i32, i32) {
    %c0_i32 = arith.constant 0 : i32
    return %arg1, %arg0 : i32, i32
  }
  func.func @transform_1(%arg0: i32, %arg1: i32) -> (i32, i32) {
    %c0_i32 = arith.constant 0 : i32
    %c0_i32_0 = arith.constant 0 : i32
    return %c0_i32, %arg0 : i32, i32
  }
  func.func @transform_2(%arg0: i32, %arg1: i32) -> (i32, i32) {
    %c0_i32 = arith.constant 0 : i32
    return %arg1, %arg0 : i32, i32
  }
}

</mosaic_0001>

<llo_original>
// kernel: tpu_custom_call.1
$region0: #{tpu_custom_call.1}
  #allocation0 [shape = 'u32[]', space=smem, size = 0x4, offset = 0x4, fixed_abs, tag = 'smem constant byte address 0x4 - core index']
  #allocation1 [shape = 'u32[144,128]{1,0:T(1,128)}', space=vmem, size = 0x12000, scoped, tag = 'internal scratch']
  %s0 = inlined_call_operand.hbm [shape: f32[2,256], index: 0, kind: input, shape index: {}]
  %s1 = inlined_call_operand.vmem [shape: f32[1,256], index: 1, kind: input, shape index: {}]
  %s2 = inlined_call_operand.hbm [shape: f32[2,256], index: 2, kind: output, shape index: {}]
  %s3 = sld [smem:[#allocation0]]
  $region22: #{tpu_custom_call.1} parent=0
    _
  %s5 = ssub.s32 1, %s3
  %s6 = scalar_select 0, %s5, %s3
  $region1: #{tpu_custom_call.1} parent=0
    #allocation2 [shape = 'u8[2048]{0}', space=vmem, size = 0x800, scoped, tag = 'input window, operand 0, single buffered']
    #allocation3 [shape = 's32[1]{0}', space=sflag, size = 0x4, scoped, tag = 'scoped memory for tpu_custom_call.1']
    #allocation4 [shape = 's32[1]{0}', space=sflag, size = 0x4, scoped, tag = 'scoped memory for tpu_custom_call.1']
    #allocation5 [shape = 'u8[2048]{0}', space=vmem, size = 0x800, scoped, tag = 'output window, operand 0, single buffered']
    %7 = vsyncpa [#allocation3], 0
    %8 = vsyncpa [#allocation4], 0
    // Predicated region
    $region2: #{tpu_custom_call.1} parent=1 // pred_check
      _
    $region3: #{tpu_custom_call.1} parent=1 // pred_check_branch
      %10 = sbr.rel (0) target = $region5
    $region4: #{tpu_custom_call.1} parent=1 // pred_region
      %s12 = ssub.s32 64, 64
      %13 = vsyncadd [#allocation3], %s12
      %s15 = sshll.u32 [#allocation2], 4
      %s16 = int_to_ptr.vmem [resolvable:$true] %s15
      %18 = dma.hbm_to_vmem [thread:$0]  %s0, 64, %s16, [#allocation3]
    $region5: #{tpu_custom_call.1} parent=1 // pred_fallthru
      _
    // Predicated region
    $region6: #{tpu_custom_call.1} parent=1 // pred_check
      _
    $region7: #{tpu_custom_call.1} parent=1 // pred_check_branch
      %20 = sbr.rel (0) target = $region9
    $region8: #{tpu_custom_call.1} parent=1 // pred_region
      _
    $region9: #{tpu_custom_call.1} parent=1 // pred_fallthru
      _
    // Predicated region
    $region10: #{tpu_custom_call.1} parent=1 // pred_check
      _
    $region11: #{tpu_custom_call.1} parent=1 // pred_check_branch
      %22 = sbr.rel (0) target = $region13
    $region12: #{tpu_custom_call.1} parent=1 // pred_region
      %23 = dma.done [#allocation3], 64
    $region13: #{tpu_custom_call.1} parent=1 // pred_fallthru
      _
    %v24 = vld [vmem:[#allocation2] sm:$0xf]
    %v25 = vmul.f32 %v24, 5.656854
    %v26 = vld [vmem:[%s1] sm:$0x3]
    %v28 = vlaneseq
    %v29 = vshrl.u32 %v28, 7
    %v30 = vsub.s32 0, %v29
    %v31 = vrot.slane %v26, %v30
    %v32 = vlaneseq
    %v33 = vshrl.u32 %v32, 7
    %v34 = vsub.s32 1, %v33
    %v35 = vrot.slane %v26, %v34
    %v36 = vcombine.low %v31, %v35
    %v38 = vunpack.c.l.s4 1983009808
    %v39 = vunpack.c.0.s8 %v38
    %v40 = vlaneseq
    %v41 = vshrl.u32 %v40, 7
    %v42 = vsub.s32 %v39, %v41
    %v43 = vrot.slane %v36, %v42
    %v45 = vadd.f32 %v25, %v43
    %46 = vst [vmem:[#allocation5] sm:$0xf] %v45
    // Predicated region
    $region14: #{tpu_custom_call.1} parent=1 // pred_check
      _
    $region15: #{tpu_custom_call.1} parent=1 // pred_check_branch
      %48 = sbr.rel (0) target = $region17
    $region16: #{tpu_custom_call.1} parent=1 // pred_region
      %s50 = ssub.s32 64, 64
      %51 = vsyncadd [#allocation4], %s50
      %s53 = sshll.u32 [#allocation5], 4
      %s54 = int_to_ptr.vmem [resolvable:$true] %s53
      %56 = dma.vmem_to_hbm [thread:$0]  %s54, 64, %s2, [#allocation4]
    $region17: #{tpu_custom_call.1} parent=1 // pred_fallthru
      _
    // Predicated region
    $region18: #{tpu_custom_call.1} parent=1 // pred_check
      _
    $region19: #{tpu_custom_call.1} parent=1 // pred_check_branch
      %58 = sbr.rel (0) target = $region21
    $region20: #{tpu_custom_call.1} parent=1 // pred_region
      %59 = dma.done [#allocation4], 64
    $region21: #{tpu_custom_call.1} parent=1 // pred_fallthru
      _
    %60 = vsyncpa [#allocation3], 1
    %61 = vsyncpa [#allocation4], 1

</llo_original>
